<compile_context>
chip_gen: v6e
topology: v6e:2x2x1
jax: 0.10.0
libtpu: 0.0.40
codegen_flags: <defaults>
</compile_context>

<pallas_src>
import functools

import numpy as np
import jax
import jax.numpy as jnp
from jax.experimental import pallas as pl
from jax.experimental.pallas import tpu as pltpu

EPS = 1e-5  # nn.BatchNorm2d default


def resblock_kernel(x_ref, w1_ref, w2_ref, mask_ref,
                    g1_ref, b1_ref, g2_ref, b2_ref, out_ref,
                    *, Cp, W, L):
    """All activations live as (Cp, L) with L = N*H*W on the lane axis."""
    offsets = [dy * W + dx for dy in (-1, 0, 1) for dx in (-1, 0, 1)]

    xv = x_ref[...]                                   # (Cp, L), pad channels are 0

    def conv3x3(act, w2d):
        """3x3 'same' conv over the whole batch as one (Cp, 9*Cp)x(9*Cp, L) matmul."""
        taps = []
        for t, off in enumerate(offsets):
            if off == 0:
                taps.append(act)                      # center tap: mask == 1
            else:
                # tap[p] = act[p + off]; wrap lanes are always invalid taps -> masked.
                rolled = pltpu.roll(act, shift=(-off) % L, axis=1)
                taps.append(rolled * mask_ref[t * Cp:(t + 1) * Cp, :])
        patch = jnp.concatenate(taps, axis=0)         # (9*Cp, L), in registers
        return jnp.dot(w2d, patch, preferred_element_type=jnp.float32)  # (Cp, L)

    def batchnorm(y, gamma, beta):
        """Training-mode BN: per-channel stats over the whole lane axis (N*H*W)."""
        inv_cnt = 1.0 / float(L)
        mean = jnp.sum(y, axis=1, keepdims=True) * inv_cnt            # (Cp, 1)
        var = jnp.sum(y * y, axis=1, keepdims=True) * inv_cnt - mean * mean
        scale = jax.lax.rsqrt(var + EPS) * gamma                      # (Cp, 1)
        return (y - mean) * scale + beta

    # conv1 -> bn1 -> relu
    h = conv3x3(xv, w1_ref[...])
    h = jnp.maximum(batchnorm(h, g1_ref[...], b1_ref[...]), 0.0)

    # conv2 -> bn2
    h = conv3x3(h, w2_ref[...])
    h = batchnorm(h, g2_ref[...], b2_ref[...])

    # residual add (downsample is None, stride=1) + relu; fully dense store.
    out_ref[...] = jnp.maximum(h + xv, 0.0)


def _tap_masks(N, Cp, H, W):
    """Constant 0/1 validity masks for the 9 taps, laid out as the (9*Cp, N*HW) patch."""
    HW = H * W
    hh, ww = np.meshgrid(np.arange(H), np.arange(W), indexing="ij")
    blocks = []
    for dy in (-1, 0, 1):
        for dx in (-1, 0, 1):
            valid = ((hh + dy >= 0) & (hh + dy < H) &
                     (ww + dx >= 0) & (ww + dx < W)).reshape(HW)
            row = np.tile(valid.astype(np.float32), N)               # (N*HW,)
            blocks.append(np.repeat(row[None, :], Cp, axis=0))       # (Cp, N*HW)
    return jnp.asarray(np.concatenate(blocks, axis=0))               # (9*Cp, N*HW)


@jax.jit
def resblock_forward(x_nchw, conv1_w, conv2_w, gamma1, beta1, gamma2, beta2):
    """x_nchw: (N, C, H, W); conv*_w: (Cout, Cin, 3, 3) — PyTorch conventions."""
    N, Cin, H, W = x_nchw.shape
    Cout = conv1_w.shape[0]
    assert Cin == Cout, "stride=1 / downsample=None path requires in_channel == out_channel"
    # TODO(synk): downsample branch (self.downsample) is None in this module's default config.
    HW = H * W
    L = N * HW
    Cp = ((max(Cin, Cout) + 7) // 8) * 8        # channel pad to the 8-sublane tile
    Kp = 9 * Cp                                  # im2col K, 8-aligned by construction

    # (N, C, H, W) -> (Cp, N*HW): channels on sublanes, batch*space on lanes.
    x2 = jnp.transpose(x_nchw, (1, 0, 2, 3)).reshape(Cin, L).astype(jnp.float32)
    x2 = jnp.pad(x2, ((0, Cp - Cin), (0, 0)))

    # OIHW -> (Cout, kh, kw, Cin) (channel-padded) -> (Cp, 9*Cp);
    # K index = (kh*3 + kw)*Cp + cin matches the kernel's tap/channel ordering.
    def fold_w(w):
        wt = jnp.transpose(w, (0, 2, 3, 1)).astype(jnp.float32)       # (Cout,3,3,Cin)
        wt = jnp.pad(wt, ((0, Cp - Cout), (0, 0), (0, 0), (0, Cp - Cin)))
        return wt.reshape(Cp, Kp)

    w1 = fold_w(conv1_w)
    w2 = fold_w(conv2_w)

    def fold_p(p):
        return jnp.pad(p.reshape(-1, 1).astype(jnp.float32), ((0, Cp - Cout), (0, 0)))

    g1, b1, g2, b2 = (fold_p(gamma1), fold_p(beta1), fold_p(gamma2), fold_p(beta2))
    masks = _tap_masks(N, Cp, H, W)                                   # (Kp, L) constant

    kernel = functools.partial(resblock_kernel, Cp=Cp, W=W, L=L)

    flops = 2 * (2 * Cp * Kp * L) + 24 * Cp * L
    bytes_accessed = 4 * (2 * Cp * L + Kp * L + 2 * Cp * Kp + 4 * Cp)

    out2 = pl.pallas_call(
        kernel,
        out_shape=jax.ShapeDtypeStruct((Cp, L), jnp.float32),
        grid=(1,),
        in_specs=[
            pl.BlockSpec((Cp, L), lambda i: (0, 0)),        # x (dense, lane-major)
            pl.BlockSpec((Cp, Kp), lambda i: (0, 0)),       # conv1 weight (folded, K-aligned)
            pl.BlockSpec((Cp, Kp), lambda i: (0, 0)),       # conv2 weight (folded, K-aligned)
            pl.BlockSpec((Kp, L), lambda i: (0, 0)),        # boundary masks (patch layout)
            pl.BlockSpec((Cp, 1), lambda i: (0, 0)),        # gamma1
            pl.BlockSpec((Cp, 1), lambda i: (0, 0)),        # beta1
            pl.BlockSpec((Cp, 1), lambda i: (0, 0)),        # gamma2
            pl.BlockSpec((Cp, 1), lambda i: (0, 0)),        # beta2
        ],
        out_specs=pl.BlockSpec((Cp, L), lambda i: (0, 0)),
        compiler_params=pltpu.CompilerParams(
            dimension_semantics=("arbitrary",),             # BN needs global batch stats
        ),
        cost_estimate=pl.CostEstimate(
            flops=flops, transcendentals=2 * Cp, bytes_accessed=bytes_accessed),
    )(x2, w1, w2, masks, g1, b1, g2, b2)

    # Drop channel padding, back to NCHW (cheap wrapper-side reshape/transpose).
    return jnp.transpose(out2[:Cout].reshape(Cout, N, H, W), (1, 0, 2, 3))


def resblock_reference(x, w1, w2, g1, b1, g2, b2):
    """Pure-JAX reference mirroring the PyTorch forward (training-mode BN)."""
    def bn(y, g, b):
        mean = jnp.mean(y, axis=(0, 2, 3), keepdims=True)
        var = jnp.mean((y - mean) ** 2, axis=(0, 2, 3), keepdims=True)
        return (y - mean) * jax.lax.rsqrt(var + EPS) * g.reshape(1, -1, 1, 1) + b.reshape(1, -1, 1, 1)

    dn = ("NCHW", "OIHW", "NCHW")
    out = jax.lax.conv_general_dilated(x, w1, (1, 1), ((1, 1), (1, 1)), dimension_numbers=dn)
    out = jnp.maximum(bn(out, g1, b1), 0.0)
    out = jax.lax.conv_general_dilated(out, w2, (1, 1), ((1, 1), (1, 1)), dimension_numbers=dn)
    out = bn(out, g2, b2)
    return jnp.maximum(out + x, 0.0)


if __name__ == "__main__":
    N, C, H, W = 2, 4, 16, 16

    key = jax.random.PRNGKey(0)
    kx, k1, k2 = jax.random.split(key, 3)
    x = jax.random.normal(kx, (N, C, H, W), dtype=jnp.float32)
    conv1_w = jax.random.normal(k1, (C, C, 3, 3), dtype=jnp.float32) * 0.1  # from hypernetwork
    conv2_w = jax.random.normal(k2, (C, C, 3, 3), dtype=jnp.float32) * 0.1  # from hypernetwork
    # BatchNorm2d parameters at init: weight=1, bias=0
    gamma1 = jnp.ones((C,), jnp.float32)
    beta1 = jnp.zeros((C,), jnp.float32)
    gamma2 = jnp.ones((C,), jnp.float32)
    beta2 = jnp.zeros((C,), jnp.float32)

    out = resblock_forward(x, conv1_w, conv2_w, gamma1, beta1, gamma2, beta2)
    out = jax.block_until_ready(out)

    ref = resblock_reference(x, conv1_w, conv2_w, gamma1, beta1, gamma2, beta2)
    assert out.shape == (N, C, H, W)
    assert jnp.allclose(out, ref, atol=1e-4, rtol=1e-4), float(jnp.max(jnp.abs(out - ref)))

    print("KERNEL_OK")
</pallas_src>

<mosaic_0001>
module attributes {stable_mosaic.version = 11 : i64} {
  func.func @resblock_kernel(%arg0: i32, %arg1: memref<8x512xf32, #tpu.memory_space<vmem>>, %arg2: memref<8x72xf32, #tpu.memory_space<vmem>>, %arg3: memref<8x72xf32, #tpu.memory_space<vmem>>, %arg4: memref<72x512xf32, #tpu.memory_space<vmem>>, %arg5: memref<8x1xf32, #tpu.memory_space<vmem>>, %arg6: memref<8x1xf32, #tpu.memory_space<vmem>>, %arg7: memref<8x1xf32, #tpu.memory_space<vmem>>, %arg8: memref<8x1xf32, #tpu.memory_space<vmem>>, %arg9: memref<8x512xf32, #tpu.memory_space<vmem>>) attributes {dimension_semantics = [#tpu.dimension_semantics<arbitrary>], iteration_bounds = array<i64: 1>, scalar_prefetch = 0 : i64, scratch_operands = 0 : i64, tpu.core_type = #tpu.core_type<tc>, window_params = [{pipeline_mode = #tpu.pipeline_mode<synchronous>, transform_indices = @transform_0, window_bounds = array<i64: 8, 512>}, {pipeline_mode = #tpu.pipeline_mode<synchronous>, transform_indices = @transform_1, window_bounds = array<i64: 8, 72>}, {pipeline_mode = #tpu.pipeline_mode<synchronous>, transform_indices = @transform_2, window_bounds = array<i64: 8, 72>}, {pipeline_mode = #tpu.pipeline_mode<synchronous>, transform_indices = @transform_3, window_bounds = array<i64: 72, 512>}, {pipeline_mode = #tpu.pipeline_mode<synchronous>, transform_indices = @transform_4, window_bounds = array<i64: 8, 1>}, {pipeline_mode = #tpu.pipeline_mode<synchronous>, transform_indices = @transform_5, window_bounds = array<i64: 8, 1>}, {pipeline_mode = #tpu.pipeline_mode<synchronous>, transform_indices = @transform_6, window_bounds = array<i64: 8, 1>}, {pipeline_mode = #tpu.pipeline_mode<synchronous>, transform_indices = @transform_7, window_bounds = array<i64: 8, 1>}, {pipeline_mode = #tpu.pipeline_mode<synchronous>, transform_indices = @transform_8, window_bounds = array<i64: 8, 512>}]} {
    %c0 = arith.constant 0 : index
    %c0_0 = arith.constant 0 : index
    %0 = vector.load %arg1[%c0, %c0_0] : memref<8x512xf32, #tpu.memory_space<vmem>>, vector<8x512xf32>
    %c0_1 = arith.constant 0 : index
    %c0_2 = arith.constant 0 : index
    %1 = vector.load %arg2[%c0_1, %c0_2] : memref<8x72xf32, #tpu.memory_space<vmem>>, vector<8x72xf32>
    %c17_i32 = arith.constant 17 : i32
    %2 = tpu.dynamic_rotate %0 by %c17_i32 dim 1 : vector<8x512xf32>, i32 -> vector<8x512xf32>
    %c0_3 = arith.constant 0 : index
    %c0_4 = arith.constant 0 : index
    %3 = vector.load %arg4[%c0_3, %c0_4] : memref<72x512xf32, #tpu.memory_space<vmem>>, vector<8x512xf32>
    %4 = arith.mulf %2, %3 : vector<8x512xf32>
    %c16_i32 = arith.constant 16 : i32
    %5 = tpu.dynamic_rotate %0 by %c16_i32 dim 1 : vector<8x512xf32>, i32 -> vector<8x512xf32>
    %c8 = arith.constant 8 : index
    %c0_5 = arith.constant 0 : index
    %6 = vector.load %arg4[%c8, %c0_5] : memref<72x512xf32, #tpu.memory_space<vmem>>, vector<8x512xf32>
    %7 = arith.mulf %5, %6 : vector<8x512xf32>
    %c15_i32 = arith.constant 15 : i32
    %8 = tpu.dynamic_rotate %0 by %c15_i32 dim 1 : vector<8x512xf32>, i32 -> vector<8x512xf32>
    %c16 = arith.constant 16 : index
    %c0_6 = arith.constant 0 : index
    %9 = vector.load %arg4[%c16, %c0_6] : memref<72x512xf32, #tpu.memory_space<vmem>>, vector<8x512xf32>
    %10 = arith.mulf %8, %9 : vector<8x512xf32>
    %c1_i32 = arith.constant 1 : i32
    %11 = tpu.dynamic_rotate %0 by %c1_i32 dim 1 : vector<8x512xf32>, i32 -> vector<8x512xf32>
    %c24 = arith.constant 24 : index
    %c0_7 = arith.constant 0 : index
    %12 = vector.load %arg4[%c24, %c0_7] : memref<72x512xf32, #tpu.memory_space<vmem>>, vector<8x512xf32>
    %13 = arith.mulf %11, %12 : vector<8x512xf32>
    %c511_i32 = arith.constant 511 : i32
    %14 = tpu.dynamic_rotate %0 by %c511_i32 dim 1 : vector<8x512xf32>, i32 -> vector<8x512xf32>
    %c40 = arith.constant 40 : index
    %c0_8 = arith.constant 0 : index
    %15 = vector.load %arg4[%c40, %c0_8] : memref<72x512xf32, #tpu.memory_space<vmem>>, vector<8x512xf32>
    %16 = arith.mulf %14, %15 : vector<8x512xf32>
    %c497_i32 = arith.constant 497 : i32
    %17 = tpu.dynamic_rotate %0 by %c497_i32 dim 1 : vector<8x512xf32>, i32 -> vector<8x512xf32>
    %c48 = arith.constant 48 : index
    %c0_9 = arith.constant 0 : index
    %18 = vector.load %arg4[%c48, %c0_9] : memref<72x512xf32, #tpu.memory_space<vmem>>, vector<8x512xf32>
    %19 = arith.mulf %17, %18 : vector<8x512xf32>
    %c496_i32 = arith.constant 496 : i32
    %20 = tpu.dynamic_rotate %0 by %c496_i32 dim 1 : vector<8x512xf32>, i32 -> vector<8x512xf32>
    %c56 = arith.constant 56 : index
    %c0_10 = arith.constant 0 : index
    %21 = vector.load %arg4[%c56, %c0_10] : memref<72x512xf32, #tpu.memory_space<vmem>>, vector<8x512xf32>
    %22 = arith.mulf %20, %21 : vector<8x512xf32>
    %c495_i32 = arith.constant 495 : i32
    %23 = tpu.dynamic_rotate %0 by %c495_i32 dim 1 : vector<8x512xf32>, i32 -> vector<8x512xf32>
    %c64 = arith.constant 64 : index
    %c0_11 = arith.constant 0 : index
    %24 = vector.load %arg4[%c64, %c0_11] : memref<72x512xf32, #tpu.memory_space<vmem>>, vector<8x512xf32>
    %25 = arith.mulf %23, %24 : vector<8x512xf32>
    %26 = tpu.concatenate %4, %7, %10, %13, %0, %16, %19, %22, %25 in 0 : vector<8x512xf32>, vector<8x512xf32>, vector<8x512xf32>, vector<8x512xf32>, vector<8x512xf32>, vector<8x512xf32>, vector<8x512xf32>, vector<8x512xf32>, vector<8x512xf32> -> vector<72x512xf32>
    %cst = arith.constant dense<0.000000e+00> : vector<8x512xf32>
    %27 = tpu.matmul %1, %26, %cst {dimension_numbers = #tpu.dot_dimension_numbers<[1], [0], [0], [1], [0, 0, 1, 1], [], []>} : vector<8x72xf32>, vector<72x512xf32>, vector<8x512xf32> -> vector<8x512xf32>
    %c0_12 = arith.constant 0 : index
    %c0_13 = arith.constant 0 : index
    %28 = vector.load %arg5[%c0_12, %c0_13] : memref<8x1xf32, #tpu.memory_space<vmem>>, vector<8x1xf32>
    %c0_14 = arith.constant 0 : index
    %c0_15 = arith.constant 0 : index
    %29 = vector.load %arg6[%c0_14, %c0_15] : memref<8x1xf32, #tpu.memory_space<vmem>>, vector<8x1xf32>
    %cst_16 = arith.constant dense<0.000000e+00> : vector<8xf32>
    %30 = vector.multi_reduction <add>, %27, %cst_16 [1] : vector<8x512xf32> to vector<8xf32>
    %31 = vector.shape_cast %30 : vector<8xf32> to vector<8x1xf32>
    %cst_17 = arith.constant 0.001953125 : f32
    %32 = vector.broadcast %cst_17 : f32 to vector<8x1xf32>
    %33 = arith.mulf %31, %32 : vector<8x1xf32>
    %34 = arith.mulf %27, %27 : vector<8x512xf32>
    %cst_18 = arith.constant dense<0.000000e+00> : vector<8xf32>
    %35 = vector.multi_reduction <add>, %34, %cst_18 [1] : vector<8x512xf32> to vector<8xf32>
    %36 = vector.shape_cast %35 : vector<8xf32> to vector<8x1xf32>
    %cst_19 = arith.constant 0.001953125 : f32
    %37 = vector.broadcast %cst_19 : f32 to vector<8x1xf32>
    %38 = arith.mulf %36, %37 : vector<8x1xf32>
    %39 = arith.mulf %33, %33 : vector<8x1xf32>
    %40 = arith.subf %38, %39 : vector<8x1xf32>
    %cst_20 = arith.constant 9.99999974E-6 : f32
    %41 = vector.broadcast %cst_20 : f32 to vector<8x1xf32>
    %42 = arith.addf %40, %41 : vector<8x1xf32>
    %43 = math.rsqrt %42 : vector<8x1xf32>
    %44 = arith.mulf %43, %28 : vector<8x1xf32>
    %45 = vector.broadcast %33 : vector<8x1xf32> to vector<8x512xf32>
    %46 = arith.subf %27, %45 : vector<8x512xf32>
    %47 = vector.broadcast %44 : vector<8x1xf32> to vector<8x512xf32>
    %48 = arith.mulf %46, %47 : vector<8x512xf32>
    %49 = vector.broadcast %29 : vector<8x1xf32> to vector<8x512xf32>
    %50 = arith.addf %48, %49 : vector<8x512xf32>
    %cst_21 = arith.constant 0.000000e+00 : f32
    %51 = vector.broadcast %cst_21 : f32 to vector<8x512xf32>
    %52 = arith.maximumf %50, %51 : vector<8x512xf32>
    %c0_22 = arith.constant 0 : index
    %c0_23 = arith.constant 0 : index
    %53 = vector.load %arg3[%c0_22, %c0_23] : memref<8x72xf32, #tpu.memory_space<vmem>>, vector<8x72xf32>
    %c17_i32_24 = arith.constant 17 : i32
    %54 = tpu.dynamic_rotate %52 by %c17_i32_24 dim 1 : vector<8x512xf32>, i32 -> vector<8x512xf32>
    %c0_25 = arith.constant 0 : index
    %c0_26 = arith.constant 0 : index
    %55 = vector.load %arg4[%c0_25, %c0_26] : memref<72x512xf32, #tpu.memory_space<vmem>>, vector<8x512xf32>
    %56 = arith.mulf %54, %55 : vector<8x512xf32>
    %c16_i32_27 = arith.constant 16 : i32
    %57 = tpu.dynamic_rotate %52 by %c16_i32_27 dim 1 : vector<8x512xf32>, i32 -> vector<8x512xf32>
    %c8_28 = arith.constant 8 : index
    %c0_29 = arith.constant 0 : index
    %58 = vector.load %arg4[%c8_28, %c0_29] : memref<72x512xf32, #tpu.memory_space<vmem>>, vector<8x512xf32>
    %59 = arith.mulf %57, %58 : vector<8x512xf32>
    %c15_i32_30 = arith.constant 15 : i32
    %60 = tpu.dynamic_rotate %52 by %c15_i32_30 dim 1 : vector<8x512xf32>, i32 -> vector<8x512xf32>
    %c16_31 = arith.constant 16 : index
    %c0_32 = arith.constant 0 : index
    %61 = vector.load %arg4[%c16_31, %c0_32] : memref<72x512xf32, #tpu.memory_space<vmem>>, vector<8x512xf32>
    %62 = arith.mulf %60, %61 : vector<8x512xf32>
    %c1_i32_33 = arith.constant 1 : i32
    %63 = tpu.dynamic_rotate %52 by %c1_i32_33 dim 1 : vector<8x512xf32>, i32 -> vector<8x512xf32>
    %c24_34 = arith.constant 24 : index
    %c0_35 = arith.constant 0 : index
    %64 = vector.load %arg4[%c24_34, %c0_35] : memref<72x512xf32, #tpu.memory_space<vmem>>, vector<8x512xf32>
    %65 = arith.mulf %63, %64 : vector<8x512xf32>
    %c511_i32_36 = arith.constant 511 : i32
    %66 = tpu.dynamic_rotate %52 by %c511_i32_36 dim 1 : vector<8x512xf32>, i32 -> vector<8x512xf32>
    %c40_37 = arith.constant 40 : index
    %c0_38 = arith.constant 0 : index
    %67 = vector.load %arg4[%c40_37, %c0_38] : memref<72x512xf32, #tpu.memory_space<vmem>>, vector<8x512xf32>
    %68 = arith.mulf %66, %67 : vector<8x512xf32>
    %c497_i32_39 = arith.constant 497 : i32
    %69 = tpu.dynamic_rotate %52 by %c497_i32_39 dim 1 : vector<8x512xf32>, i32 -> vector<8x512xf32>
    %c48_40 = arith.constant 48 : index
    %c0_41 = arith.constant 0 : index
    %70 = vector.load %arg4[%c48_40, %c0_41] : memref<72x512xf32, #tpu.memory_space<vmem>>, vector<8x512xf32>
    %71 = arith.mulf %69, %70 : vector<8x512xf32>
    %c496_i32_42 = arith.constant 496 : i32
    %72 = tpu.dynamic_rotate %52 by %c496_i32_42 dim 1 : vector<8x512xf32>, i32 -> vector<8x512xf32>
    %c56_43 = arith.constant 56 : index
    %c0_44 = arith.constant 0 : index
    %73 = vector.load %arg4[%c56_43, %c0_44] : memref<72x512xf32, #tpu.memory_space<vmem>>, vector<8x512xf32>
    %74 = arith.mulf %72, %73 : vector<8x512xf32>
    %c495_i32_45 = arith.constant 495 : i32
    %75 = tpu.dynamic_rotate %52 by %c495_i32_45 dim 1 : vector<8x512xf32>, i32 -> vector<8x512xf32>
    %c64_46 = arith.constant 64 : index
    %c0_47 = arith.constant 0 : index
    %76 = vector.load %arg4[%c64_46, %c0_47] : memref<72x512xf32, #tpu.memory_space<vmem>>, vector<8x512xf32>
    %77 = arith.mulf %75, %76 : vector<8x512xf32>
    %78 = tpu.concatenate %56, %59, %62, %65, %52, %68, %71, %74, %77 in 0 : vector<8x512xf32>, vector<8x512xf32>, vector<8x512xf32>, vector<8x512xf32>, vector<8x512xf32>, vector<8x512xf32>, vector<8x512xf32>, vector<8x512xf32>, vector<8x512xf32> -> vector<72x512xf32>
    %cst_48 = arith.constant dense<0.000000e+00> : vector<8x512xf32>
    %79 = tpu.matmul %53, %78, %cst_48 {dimension_numbers = #tpu.dot_dimension_numbers<[1], [0], [0], [1], [0, 0, 1, 1], [], []>} : vector<8x72xf32>, vector<72x512xf32>, vector<8x512xf32> -> vector<8x512xf32>
    %c0_49 = arith.constant 0 : index
    %c0_50 = arith.constant 0 : index
    %80 = vector.load %arg7[%c0_49, %c0_50] : memref<8x1xf32, #tpu.memory_space<vmem>>, vector<8x1xf32>
    %c0_51 = arith.constant 0 : index
    %c0_52 = arith.constant 0 : index
    %81 = vector.load %arg8[%c0_51, %c0_52] : memref<8x1xf32, #tpu.memory_space<vmem>>, vector<8x1xf32>
    %cst_53 = arith.constant dense<0.000000e+00> : vector<8xf32>
    %82 = vector.multi_reduction <add>, %79, %cst_53 [1] : vector<8x512xf32> to vector<8xf32>
    %83 = vector.shape_cast %82 : vector<8xf32> to vector<8x1xf32>
    %cst_54 = arith.constant 0.001953125 : f32
    %84 = vector.broadcast %cst_54 : f32 to vector<8x1xf32>
    %85 = arith.mulf %83, %84 : vector<8x1xf32>
    %86 = arith.mulf %79, %79 : vector<8x512xf32>
    %cst_55 = arith.constant dense<0.000000e+00> : vector<8xf32>
    %87 = vector.multi_reduction <add>, %86, %cst_55 [1] : vector<8x512xf32> to vector<8xf32>
    %88 = vector.shape_cast %87 : vector<8xf32> to vector<8x1xf32>
    %cst_56 = arith.constant 0.001953125 : f32
    %89 = vector.broadcast %cst_56 : f32 to vector<8x1xf32>
    %90 = arith.mulf %88, %89 : vector<8x1xf32>
    %91 = arith.mulf %85, %85 : vector<8x1xf32>
    %92 = arith.subf %90, %91 : vector<8x1xf32>
    %cst_57 = arith.constant 9.99999974E-6 : f32
    %93 = vector.broadcast %cst_57 : f32 to vector<8x1xf32>
    %94 = arith.addf %92, %93 : vector<8x1xf32>
    %95 = math.rsqrt %94 : vector<8x1xf32>
    %96 = arith.mulf %95, %80 : vector<8x1xf32>
    %97 = vector.broadcast %85 : vector<8x1xf32> to vector<8x512xf32>
    %98 = arith.subf %79, %97 : vector<8x512xf32>
    %99 = vector.broadcast %96 : vector<8x1xf32> to vector<8x512xf32>
    %100 = arith.mulf %98, %99 : vector<8x512xf32>
    %101 = vector.broadcast %81 : vector<8x1xf32> to vector<8x512xf32>
    %102 = arith.addf %100, %101 : vector<8x512xf32>
    %103 = arith.addf %102, %0 : vector<8x512xf32>
    %cst_58 = arith.constant 0.000000e+00 : f32
    %104 = vector.broadcast %cst_58 : f32 to vector<8x512xf32>
    %105 = arith.maximumf %103, %104 : vector<8x512xf32>
    %c0_59 = arith.constant 0 : index
    %c0_60 = arith.constant 0 : index
    %106 = vector.load %arg9[%c0_59, %c0_60] : memref<8x512xf32, #tpu.memory_space<vmem>>, vector<8x512xf32>
    tpu.vector_store %arg9[%c0_59, %c0_60], %105 {strides = array<i32>} : memref<8x512xf32, #tpu.memory_space<vmem>>, vector<8x512xf32>,
    return
  }
  func.func @transform_0(%arg0: i32) -> (i32, i32) {
    %c0_i32 = arith.constant 0 : i32
    %c0_i32_0 = arith.constant 0 : i32
    %c0_i32_1 = arith.constant 0 : i32
    return %c0_i32, %c0_i32_0 : i32, i32
  }
  func.func @transform_1(%arg0: i32) -> (i32, i32) {
    %c0_i32 = arith.constant 0 : i32
    %c0_i32_0 = arith.constant 0 : i32
    %c0_i32_1 = arith.constant 0 : i32
    return %c0_i32, %c0_i32_0 : i32, i32
  }
  func.func @transform_2(%arg0: i32) -> (i32, i32) {
    %c0_i32 = arith.constant 0 : i32
    %c0_i32_0 = arith.constant 0 : i32
    %c0_i32_1 = arith.constant 0 : i32
    return %c0_i32, %c0_i32_0 : i32, i32
  }
  func.func @transform_3(%arg0: i32) -> (i32, i32) {
    %c0_i32 = arith.constant 0 : i32
    %c0_i32_0 = arith.constant 0 : i32
    %c0_i32_1 = arith.constant 0 : i32
    return %c0_i32, %c0_i32_0 : i32, i32
  }
  func.func @transform_4(%arg0: i32) -> (i32, i32) {
    %c0_i32 = arith.constant 0 : i32
    %c0_i32_0 = arith.constant 0 : i32
    %c0_i32_1 = arith.constant 0 : i32
    return %c0_i32, %c0_i32_0 : i32, i32
  }
  func.func @transform_5(%arg0: i32) -> (i32, i32) {
    %c0_i32 = arith.constant 0 : i32
    %c0_i32_0 = arith.constant 0 : i32
    %c0_i32_1 = arith.constant 0 : i32
    return %c0_i32, %c0_i32_0 : i32, i32
  }
  func.func @transform_6(%arg0: i32) -> (i32, i32) {
    %c0_i32 = arith.constant 0 : i32
    %c0_i32_0 = arith.constant 0 : i32
    %c0_i32_1 = arith.constant 0 : i32
    return %c0_i32, %c0_i32_0 : i32, i32
  }
  func.func @transform_7(%arg0: i32) -> (i32, i32) {
    %c0_i32 = arith.constant 0 : i32
    %c0_i32_0 = arith.constant 0 : i32
    %c0_i32_1 = arith.constant 0 : i32
    return %c0_i32, %c0_i32_0 : i32, i32
  }
  func.func @transform_8(%arg0: i32) -> (i32, i32) {
    %c0_i32 = arith.constant 0 : i32
    %c0_i32_0 = arith.constant 0 : i32
    %c0_i32_1 = arith.constant 0 : i32
    return %c0_i32, %c0_i32_0 : i32, i32
  }
}

</mosaic_0001>

<llo_original>
// kernel: resblock_forward.1
$region0: #{resblock_forward.1}
  #allocation0 [shape = 'u32[]', space=smem, size = 0x4, offset = 0x4, fixed_abs, tag = 'smem constant byte address 0x4 - core index']
  #allocation1 [shape = 'u32[144,128]{1,0:T(1,128)}', space=vmem, size = 0x12000, scoped, tag = 'internal scratch']
  %s0 = inlined_call_operand.vmem [shape: f32[8,512], index: 0, kind: input, shape index: {}]
  %s1 = inlined_call_operand.vmem [shape: f32[8,72], index: 1, kind: input, shape index: {}]
  %s2 = inlined_call_operand.vmem [shape: f32[8,72], index: 2, kind: input, shape index: {}]
  %s3 = inlined_call_operand.vmem [shape: f32[72,512], index: 3, kind: input, shape index: {}]
  %s4 = inlined_call_operand.vmem [shape: f32[8,1], index: 4, kind: input, shape index: {}]
  %s5 = inlined_call_operand.vmem [shape: f32[8,1], index: 5, kind: input, shape index: {}]
  %s6 = inlined_call_operand.vmem [shape: f32[8,1], index: 6, kind: input, shape index: {}]
  %s7 = inlined_call_operand.vmem [shape: f32[8,1], index: 7, kind: input, shape index: {}]
  %s8 = inlined_call_operand.vmem [shape: f32[8,512], index: 8, kind: output, shape index: {}]
  %s9 = sld [smem:[#allocation0]]
  $region42: #{resblock_forward.1} parent=0
    _
  %s11 = ssub.s32 1, %s9
  %s12 = scalar_select 0, %s11, %s9
  // Predicated region
  $region2: #{resblock_forward.1} parent=0 // pred_check
    _
  $region3: #{resblock_forward.1} parent=0 // pred_check_branch
    %14 = sbr.rel (0) target = $region5
  $region4: #{resblock_forward.1} parent=0 // pred_region
    _
  $region5: #{resblock_forward.1} parent=0 // pred_fallthru
    _
  // Predicated region
  $region6: #{resblock_forward.1} parent=0 // pred_check
    _
  $region7: #{resblock_forward.1} parent=0 // pred_check_branch
    %16 = sbr.rel (0) target = $region9
  $region8: #{resblock_forward.1} parent=0 // pred_region
    _
  $region9: #{resblock_forward.1} parent=0 // pred_fallthru
    _
  // Predicated region
  $region10: #{resblock_forward.1} parent=0 // pred_check
    _
  $region11: #{resblock_forward.1} parent=0 // pred_check_branch
    %18 = sbr.rel (0) target = $region13
  $region12: #{resblock_forward.1} parent=0 // pred_region
    _
  $region13: #{resblock_forward.1} parent=0 // pred_fallthru
    _
  // Predicated region
  $region14: #{resblock_forward.1} parent=0 // pred_check
    _
  $region15: #{resblock_forward.1} parent=0 // pred_check_branch
    %20 = sbr.rel (0) target = $region17
  $region16: #{resblock_forward.1} parent=0 // pred_region
    _
  $region17: #{resblock_forward.1} parent=0 // pred_fallthru
    _
  // Predicated region
  $region18: #{resblock_forward.1} parent=0 // pred_check
    _
  $region19: #{resblock_forward.1} parent=0 // pred_check_branch
    %22 = sbr.rel (0) target = $region21
  $region20: #{resblock_forward.1} parent=0 // pred_region
    _
  $region21: #{resblock_forward.1} parent=0 // pred_fallthru
    _
  // Predicated region
  $region22: #{resblock_forward.1} parent=0 // pred_check
    _
  $region23: #{resblock_forward.1} parent=0 // pred_check_branch
    %24 = sbr.rel (0) target = $region25
  $region24: #{resblock_forward.1} parent=0 // pred_region
    _
  $region25: #{resblock_forward.1} parent=0 // pred_fallthru
    _
  // Predicated region
  $region26: #{resblock_forward.1} parent=0 // pred_check
    _
  $region27: #{resblock_forward.1} parent=0 // pred_check_branch
    %26 = sbr.rel (0) target = $region29
  $region28: #{resblock_forward.1} parent=0 // pred_region
    _
  $region29: #{resblock_forward.1} parent=0 // pred_fallthru
    _
  // Predicated region
  $region30: #{resblock_forward.1} parent=0 // pred_check
    _
  $region31: #{resblock_forward.1} parent=0 // pred_check_branch
    %28 = sbr.rel (0) target = $region33
  $region32: #{resblock_forward.1} parent=0 // pred_region
    _
  $region33: #{resblock_forward.1} parent=0 // pred_fallthru
    _
  %v29 = vld [vmem:[%s0] sm:$0xff]
  %v30 = vld [vmem:[%s0 + $0x8] sm:$0xff]
  %v31 = vld [vmem:[%s0 + $0x10] sm:$0xff]
  %v32 = vld [vmem:[%s0 + $0x18] sm:$0xff]
  %v33 = vld [vmem:[%s1] sm:$0xff]
  %34 = vrot.lane.b32.xlu0 %v29, 17
  %v35 = vpop.permute.xlu0 %34
  %36 = vrot.lane.b32.xlu0 %v30, 17
  %v37 = vpop.permute.xlu0 %36
  %38 = vrot.lane.b32.xlu0 %v31, 17
  %v39 = vpop.permute.xlu0 %38
  %40 = vrot.lane.b32.xlu0 %v32, 17
  %v41 = vpop.permute.xlu0 %40
  %v42 = vlaneseq
  %v43 = vand.u32 %v42, 127
  %vm44 = vcmp.lt.s32.totalorder %v43, 17
  %v45 = vsel %vm44, %v39, %v41
  %v46 = vsel %vm44, %v37, %v39
  %v47 = vsel %vm44, %v35, %v37
  %v48 = vsel %vm44, %v41, %v35
  %v49 = vld [vmem:[%s3] sm:$0xff]
  %v50 = vld [vmem:[%s3 + $0x8] sm:$0xff]
  %v51 = vld [vmem:[%s3 + $0x10] sm:$0xff]
  %v52 = vld [vmem:[%s3 + $0x18] sm:$0xff]
  %v53 = vmul.f32 %v48, %v49
  %v54 = vmul.f32 %v47, %v50
  %v55 = vmul.f32 %v46, %v51
  %v56 = vmul.f32 %v45, %v52
  %57 = vrot.lane.b32.xlu0 %v29, 16
  %v58 = vpop.permute.xlu0 %57
  %59 = vrot.lane.b32.xlu0 %v30, 16
  %v60 = vpop.permute.xlu0 %59
  %61 = vrot.lane.b32.xlu0 %v31, 16
  %v62 = vpop.permute.xlu0 %61
  %63 = vrot.lane.b32.xlu0 %v32, 16
  %v64 = vpop.permute.xlu0 %63
  %vm65 = vcmp.lt.s32.totalorder %v43, 16
  %v66 = vsel %vm65, %v62, %v64
  %v67 = vsel %vm65, %v60, %v62
  %v68 = vsel %vm65, %v58, %v60
  %v69 = vsel %vm65, %v64, %v58
  %v70 = vld [vmem:[%s3 + $0x20] sm:$0xff]
  %v71 = vld [vmem:[%s3 + $0x28] sm:$0xff]
  %v72 = vld [vmem:[%s3 + $0x30] sm:$0xff]
  %v73 = vld [vmem:[%s3 + $0x38] sm:$0xff]
  %v74 = vmul.f32 %v69, %v70
  %v75 = vmul.f32 %v68, %v71
  %v76 = vmul.f32 %v67, %v72
  %v77 = vmul.f32 %v66, %v73
  %78 = vrot.lane.b32.xlu0 %v29, 15
  %v79 = vpop.permute.xlu0 %78
  %80 = vrot.lane.b32.xlu0 %v30, 15
  %v81 = vpop.permute.xlu0 %80
  %82 = vrot.lane.b32.xlu0 %v31, 15
  %v83 = vpop.permute.xlu0 %82
  %84 = vrot.lane.b32.xlu0 %v32, 15
  %v85 = vpop.permute.xlu0 %84
  %vm86 = vcmp.lt.s32.totalorder %v43, 15
  %v87 = vsel %vm86, %v83, %v85
  %v88 = vsel %vm86, %v81, %v83
  %v89 = vsel %vm86, %v79, %v81
  %v90 = vsel %vm86, %v85, %v79
  %v91 = vld [vmem:[%s3 + $0x40] sm:$0xff]
  %v92 = vld [vmem:[%s3 + $0x48] sm:$0xff]
  %v93 = vld [vmem:[%s3 + $0x50] sm:$0xff]
  %v94 = vld [vmem:[%s3 + $0x58] sm:$0xff]
  %v95 = vmul.f32 %v90, %v91
  %v96 = vmul.f32 %v89, %v92
  %v97 = vmul.f32 %v88, %v93
  %v98 = vmul.f32 %v87, %v94
  %99 = vrot.lane.b32.xlu0 %v29, 1
  %v100 = vpop.permute.xlu0 %99
  %101 = vrot.lane.b32.xlu0 %v30, 1
  %v102 = vpop.permute.xlu0 %101
  %103 = vrot.lane.b32.xlu0 %v31, 1
  %v104 = vpop.permute.xlu0 %103
  %105 = vrot.lane.b32.xlu0 %v32, 1
  %v106 = vpop.permute.xlu0 %105
  %vm107 = vcmp.lt.s32.totalorder %v43, 1
  %v108 = vsel %vm107, %v104, %v106
  %v109 = vsel %vm107, %v102, %v104
  %v110 = vsel %vm107, %v100, %v102
  %v111 = vsel %vm107, %v106, %v100
  %v112 = vld [vmem:[%s3 + $0x60] sm:$0xff]
  %v113 = vld [vmem:[%s3 + $0x68] sm:$0xff]
  %v114 = vld [vmem:[%s3 + $0x70] sm:$0xff]
  %v115 = vld [vmem:[%s3 + $0x78] sm:$0xff]
  %v116 = vmul.f32 %v111, %v112
  %v117 = vmul.f32 %v110, %v113
  %v118 = vmul.f32 %v109, %v114
  %v119 = vmul.f32 %v108, %v115
  %120 = vrot.lane.b32.xlu0 %v29, 127
  %v121 = vpop.permute.xlu0 %120
  %122 = vrot.lane.b32.xlu0 %v30, 127
  %v123 = vpop.permute.xlu0 %122
  %124 = vrot.lane.b32.xlu0 %v31, 127
  %v125 = vpop.permute.xlu0 %124
  %126 = vrot.lane.b32.xlu0 %v32, 127
  %v127 = vpop.permute.xlu0 %126
  %vm128 = vcmp.lt.s32.totalorder %v43, 127
  %v129 = vsel %vm128, %v125, %v127
  %v130 = vsel %vm128, %v123, %v125
  %v131 = vsel %vm128, %v121, %v123
  %v132 = vsel %vm128, %v127, %v121
  %v133 = vld [vmem:[%s3 + $0xa0] sm:$0xff]
  %v134 = vld [vmem:[%s3 + $0xa8] sm:$0xff]
  %v135 = vld [vmem:[%s3 + $0xb0] sm:$0xff]
  %v136 = vld [vmem:[%s3 + $0xb8] sm:$0xff]
  %v137 = vmul.f32 %v131, %v133
  %v138 = vmul.f32 %v130, %v134
  %v139 = vmul.f32 %v129, %v135
  %v140 = vmul.f32 %v132, %v136
  %141 = vrot.lane.b32.xlu0 %v29, 113
  %v142 = vpop.permute.xlu0 %141
  %143 = vrot.lane.b32.xlu0 %v30, 113
  %v144 = vpop.permute.xlu0 %143
  %145 = vrot.lane.b32.xlu0 %v31, 113
  %v146 = vpop.permute.xlu0 %145
  %147 = vrot.lane.b32.xlu0 %v32, 113
  %v148 = vpop.permute.xlu0 %147
  %vm149 = vcmp.lt.s32.totalorder %v43, 113
  %v150 = vsel %vm149, %v146, %v148
  %v151 = vsel %vm149, %v144, %v146
  %v152 = vsel %vm149, %v142, %v144
  %v153 = vsel %vm149, %v148, %v142
  %v154 = vld [vmem:[%s3 + $0xc0] sm:$0xff]
  %v155 = vld [vmem:[%s3 + $0xc8] sm:$0xff]
  %v156 = vld [vmem:[%s3 + $0xd0] sm:$0xff]
  %v157 = vld [vmem:[%s3 + $0xd8] sm:$0xff]
  %v158 = vmul.f32 %v152, %v154
  %v159 = vmul.f32 %v151, %v155
  %v160 = vmul.f32 %v150, %v156
  %v161 = vmul.f32 %v153, %v157
  %162 = vrot.lane.b32.xlu0 %v29, 112
  %v163 = vpop.permute.xlu0 %162
  %164 = vrot.lane.b32.xlu0 %v30, 112
  %v165 = vpop.permute.xlu0 %164
  %166 = vrot.lane.b32.xlu0 %v31, 112
  %v167 = vpop.permute.xlu0 %166
  %168 = vrot.lane.b32.xlu0 %v32, 112
  %v169 = vpop.permute.xlu0 %168
  %vm170 = vcmp.lt.s32.totalorder %v43, 112
  %v171 = vsel %vm170, %v167, %v169
  %v172 = vsel %vm170, %v165, %v167
  %v173 = vsel %vm170, %v163, %v165
  %v174 = vsel %vm170, %v169, %v163
  %v175 = vld [vmem:[%s3 + $0xe0] sm:$0xff]
  %v176 = vld [vmem:[%s3 + $0xe8] sm:$0xff]
  %v177 = vld [vmem:[%s3 + $0xf0] sm:$0xff]
  %v178 = vld [vmem:[%s3 + $0xf8] sm:$0xff]
  %v179 = vmul.f32 %v173, %v175
  %v180 = vmul.f32 %v172, %v176
  %v181 = vmul.f32 %v171, %v177
  %v182 = vmul.f32 %v174, %v178
  %183 = vrot.lane.b32.xlu0 %v29, 111
  %v184 = vpop.permute.xlu0 %183
  %185 = vrot.lane.b32.xlu0 %v30, 111
  %v186 = vpop.permute.xlu0 %185
  %187 = vrot.lane.b32.xlu0 %v31, 111
  %v188 = vpop.permute.xlu0 %187
  %189 = vrot.lane.b32.xlu0 %v32, 111
  %v190 = vpop.permute.xlu0 %189
  %vm191 = vcmp.lt.s32.totalorder %v43, 111
  %v192 = vsel %vm191, %v188, %v190
  %v193 = vsel %vm191, %v186, %v188
  %v194 = vsel %vm191, %v184, %v186
  %v195 = vsel %vm191, %v190, %v184
  %v196 = vld [vmem:[%s3 + $0x100] sm:$0xff]
  %v197 = vld [vmem:[%s3 + $0x108] sm:$0xff]
  %v198 = vld [vmem:[%s3 + $0x110] sm:$0xff]
  %v199 = vld [vmem:[%s3 + $0x118] sm:$0xff]
  %v200 = vmul.f32 %v194, %v196
  %v201 = vmul.f32 %v193, %v197
  %v202 = vmul.f32 %v192, %v198
  %v203 = vmul.f32 %v195, %v199
  %vm204 = vcmask 588800
  %v206 = vsel %vm204, %v33, 0
  %208 = vmatprep.subr.mxu0 0.0
  %209 = vmatpush1.msra.mxu0 0.0
  %210 = vmatprep.subr.mxu0 0.0
  %211 = vmatpush1.msra.mxu0 0.0
  %212 = vmatprep.subr.mxu0 0.0
  %213 = vmatpush1.msra.mxu0 0.0
  %214 = vmatprep.subr.mxu0 0.0
  %215 = vmatpush1.msra.mxu0 0.0
  %216 = vmatprep.subr.mxu0 0.0
  %217 = vmatpush1.msra.mxu0 0.0
  %218 = vmatprep.subr.mxu0 0.0
  %219 = vmatpush1.msra.mxu0 0.0
  %220 = vmatprep.subr.mxu0 0.0
  %221 = vmatpush1.msra.mxu0 0.0
  %222 = vmatprep.subr.mxu0 %v201
  %223 = vmatpush1.msra.mxu0 %v200
  %224 = vmatprep.subr.mxu0 %v180
  %225 = vmatpush1.msra.mxu0 %v179
  %226 = vmatprep.subr.mxu0 %v159
  %227 = vmatpush1.msra.mxu0 %v158
  %228 = vmatprep.subr.mxu0 %v138
  %229 = vmatpush1.msra.mxu0 %v137
  %230 = vmatprep.subr.mxu0 %v30
  %231 = vmatpush1.msra.mxu0 %v29
  %232 = vmatprep.subr.mxu0 %v117
  %233 = vmatpush1.msra.mxu0 %v116
  %234 = vmatprep.subr.mxu0 %v96
  %235 = vmatpush1.msra.mxu0 %v95
  %236 = vmatprep.subr.mxu0 %v75
  %237 = vmatpush1.msra.mxu0 %v74
  %238 = vmatprep.subr.mxu0 %v54
  %239 = vmatpush1.msra.mxu0 %v53
  %240 = vmatprep.subr.mxu0 0.0
  %241 = vmatpush2.msra.mxu0 0.0
  %242 = vmatprep.subr.mxu0 0.0
  %243 = vmatpush2.msra.mxu0 0.0
  %244 = vmatprep.subr.mxu0 0.0
  %245 = vmatpush2.msra.mxu0 0.0
  %246 = vmatprep.subr.mxu0 0.0
  %247 = vmatpush2.msra.mxu0 0.0
  %248 = vmatprep.subr.mxu0 0.0
  %249 = vmatpush2.msra.mxu0 0.0
  %250 = vmatprep.subr.mxu0 0.0
  %251 = vmatpush2.msra.mxu0 0.0
  %252 = vmatprep.subr.mxu0 0.0
  %253 = vmatpush2.msra.mxu0 0.0
  %254 = vmatprep.subr.mxu0 0.0
  %255 = vmatpush2.msra.mxu0 0.0
  %256 = vmatprep.subr.mxu0 0.0
  %257 = vmatpush2.msra.mxu0 0.0
  %258 = vmatprep.subr.mxu0 0.0
  %259 = vmatpush2.msra.mxu0 0.0
  %260 = vmatprep.subr.mxu0 0.0
  %261 = vmatpush2.msra.mxu0 0.0
  %262 = vmatprep.subr.mxu0 0.0
  %263 = vmatpush2.msra.mxu0 0.0
  %264 = vmatprep.subr.mxu0 0.0
  %265 = vmatpush2.msra.mxu0 0.0
  %266 = vmatprep.subr.mxu0 0.0
  %267 = vmatpush2.msra.mxu0 0.0
  %268 = vmatprep.subr.mxu0 0.0
  %269 = vmatpush2.msra.mxu0 0.0
  %270 = vmatprep.subr.mxu0 0.0
  %271 = vmatpush2.msra.mxu0 0.0
  %272 = vmatprep.mubr.f32.mxu0 0.0
  %273 = vmatmul.mubr.f32.gmra.mxu0 %v206
  %v274 = vpop.f32.mrf.mxu0
  %v275 = vadd.f32 0.0, %v274
  %v276 = vpop.f32.mrf.mxu0
  %v277 = vadd.f32 0.0, %v276
  %278 = vdwg.mxu0
  %279 = vmatprep.subr.mxu0 0.0
  %280 = vmatpush1.msra.mxu0 0.0
  %281 = vmatprep.subr.mxu0 0.0
  %282 = vmatpush1.msra.mxu0 0.0
  %283 = vmatprep.subr.mxu0 0.0
  %284 = vmatpush1.msra.mxu0 0.0
  %285 = vmatprep.subr.mxu0 0.0
  %286 = vmatpush1.msra.mxu0 0.0
  %287 = vmatprep.subr.mxu0 0.0
  %288 = vmatpush1.msra.mxu0 0.0
  %289 = vmatprep.subr.mxu0 0.0
  %290 = vmatpush1.msra.mxu0 0.0
  %291 = vmatprep.subr.mxu0 0.0
  %292 = vmatpush1.msra.mxu0 0.0
  %293 = vmatprep.subr.mxu0 %v203
  %294 = vmatpush1.msra.mxu0 %v202
  %295 = vmatprep.subr.mxu0 %v182
  %296 = vmatpush1.msra.mxu0 %v181
  %297 = vmatprep.subr.mxu0 %v161
  %298 = vmatpush1.msra.mxu0 %v160
  %299 = vmatprep.subr.mxu0 %v140
  %300 = vmatpush1.msra.mxu0 %v139
  %301 = vmatprep.subr.mxu0 %v32
  %302 = vmatpush1.msra.mxu0 %v31
  %303 = vmatprep.subr.mxu0 %v119
  %304 = vmatpush1.msra.mxu0 %v118
  %305 = vmatprep.subr.mxu0 %v98
  %306 = vmatpush1.msra.mxu0 %v97
  %307 = vmatprep.subr.mxu0 %v77
  %308 = vmatpush1.msra.mxu0 %v76
  %309 = vmatprep.subr.mxu0 %v56
  %310 = vmatpush1.msra.mxu0 %v55
  %311 = vmatprep.subr.mxu0 0.0
  %312 = vmatpush2.msra.mxu0 0.0
  %313 = vmatprep.subr.mxu0 0.0
  %314 = vmatpush2.msra.mxu0 0.0
  %315 = vmatprep.subr.mxu0 0.0
  %316 = vmatpush2.msra.mxu0 0.0
  %317 = vmatprep.subr.mxu0 0.0
  %318 = vmatpush2.msra.mxu0 0.0
  %319 = vmatprep.subr.mxu0 0.0
  %320 = vmatpush2.msra.mxu0 0.0
  %321 = vmatprep.subr.mxu0 0.0
  %322 = vmatpush2.msra.mxu0 0.0
  %323 = vmatprep.subr.mxu0 0.0
  %324 = vmatpush2.msra.mxu0 0.0
  %325 = vmatprep.subr.mxu0 0.0
  %326 = vmatpush2.msra.mxu0 0.0
  %327 = vmatprep.subr.mxu0 0.0
  %328 = vmatpush2.msra.mxu0 0.0
  %329 = vmatprep.subr.mxu0 0.0
  %330 = vmatpush2.msra.mxu0 0.0
  %331 = vmatprep.subr.mxu0 0.0
  %332 = vmatpush2.msra.mxu0 0.0
  %333 = vmatprep.subr.mxu0 0.0
  %334 = vmatpush2.msra.mxu0 0.0
  %335 = vmatprep.subr.mxu0 0.0
  %336 = vmatpush2.msra.mxu0 0.0
  %337 = vmatprep.subr.mxu0 0.0
  %338 = vmatpush2.msra.mxu0 0.0
  %339 = vmatprep.subr.mxu0 0.0
  %340 = vmatpush2.msra.mxu0 0.0
  %341 = vmatprep.subr.mxu0 0.0
  %342 = vmatpush2.msra.mxu0 0.0
  %343 = vmatprep.mubr.f32.mxu0 0.0
  %344 = vmatmul.mubr.f32.gmra.mxu0 %v206
  %v345 = vpop.f32.mrf.mxu0
  %v346 = vadd.f32 0.0, %v345
  %v347 = vpop.f32.mrf.mxu0
  %v348 = vadd.f32 0.0, %v347
  %349 = vdwg.mxu0
  %v350 = vld [vmem:[%s4] sm:$0xff]
  %v351 = vld [vmem:[%s5] sm:$0xff]
  %v352 = vadd.f32 %v275, %v277
  %v353 = vadd.f32 %v352, %v346
  %v354 = vadd.f32 %v353, %v348
  %355 = vadd.xlane.f32.xlu0 %v354
  %v356 = vpop.xlane.xlu0 %355
  %v357 = vmul.f32 %v356, 0.001953125
  %v358 = vmul.f32 %v275, %v275
  %v359 = vmul.f32 %v277, %v277
  %v360 = vmul.f32 %v346, %v346
  %v361 = vmul.f32 %v348, %v348
  %v362 = vadd.f32 %v358, %v359
  %v363 = vadd.f32 %v362, %v360
  %v364 = vadd.f32 %v363, %v361
  %365 = vadd.xlane.f32.xlu0 %v364
  %v366 = vpop.xlane.xlu0 %365
  %v367 = vmul.f32 %v366, 0.001953125
  %v368 = vmul.f32 %v357, %v357
  %v369 = vsub.f32 %v367, %v368
  %v370 = vadd.f32 %v369, 1e-05
  %v371 = vrsqrt.pop %v370
  %v372 = vmul.f32 %v371, %v350
  %v373 = vsub.f32 %v275, %v357
  %v374 = vsub.f32 %v277, %v357
  %v375 = vsub.f32 %v346, %v357
  %v376 = vsub.f32 %v348, %v357
  %378 = vset.pattern.permute.xlu0 0
  %379 = vperm.xlu0 %378, %v372
  %v380 = vpop.permute.xlu0 %379
  %v382 = vmul.f32 %v373, %v380
  %v383 = vmul.f32 %v374, %v380
  %v384 = vmul.f32 %v375, %v380
  %v385 = vmul.f32 %v376, %v380
  %387 = vset.pattern.permute.xlu0 0
  %388 = vperm.xlu0 %387, %v351
  %v389 = vpop.permute.xlu0 %388
  %v391 = vadd.f32 %v382, %v389
  %v392 = vadd.f32 %v383, %v389
  %v393 = vadd.f32 %v384, %v389
  %v394 = vadd.f32 %v385, %v389
  %v395 = vmax.f32 %v391, 0.0
  %v396 = vmax.f32 %v392, 0.0
  %v397 = vmax.f32 %v393, 0.0
  %v398 = vmax.f32 %v394, 0.0
  %v399 = vld [vmem:[%s2] sm:$0xff]
  %400 = vrot.lane.b32.xlu0 %v395, 17
  %v401 = vpop.permute.xlu0 %400
  %402 = vrot.lane.b32.xlu0 %v396, 17
  %v403 = vpop.permute.xlu0 %402
  %404 = vrot.lane.b32.xlu0 %v397, 17
  %v405 = vpop.permute.xlu0 %404
  %406 = vrot.lane.b32.xlu0 %v398, 17
  %v407 = vpop.permute.xlu0 %406
  %v408 = vsel %vm44, %v405, %v407
  %v409 = vsel %vm44, %v403, %v405
  %v410 = vsel %vm44, %v401, %v403
  %v411 = vsel %vm44, %v407, %v401
  %v412 = vmul.f32 %v411, %v49
  %v413 = vmul.f32 %v410, %v50
  %v414 = vmul.f32 %v409, %v51
  %v415 = vmul.f32 %v408, %v52
  %416 = vrot.lane.b32.xlu0 %v395, 16
  %v417 = vpop.permute.xlu0 %416
  %418 = vrot.lane.b32.xlu0 %v396, 16
  %v419 = vpop.permute.xlu0 %418
  %420 = vrot.lane.b32.xlu0 %v397, 16
  %v421 = vpop.permute.xlu0 %420
  %422 = vrot.lane.b32.xlu0 %v398, 16
  %v423 = vpop.permute.xlu0 %422
  %v424 = vsel %vm65, %v421, %v423
  %v425 = vsel %vm65, %v419, %v421
  %v426 = vsel %vm65, %v417, %v419
  %v427 = vsel %vm65, %v423, %v417
  %v428 = vmul.f32 %v427, %v70
  %v429 = vmul.f32 %v426, %v71
  %v430 = vmul.f32 %v425, %v72
  %v431 = vmul.f32 %v424, %v73
  %432 = vrot.lane.b32.xlu0 %v395, 15
  %v433 = vpop.permute.xlu0 %432
  %434 = vrot.lane.b32.xlu0 %v396, 15
  %v435 = vpop.permute.xlu0 %434
  %436 = vrot.lane.b32.xlu0 %v397, 15
  %v437 = vpop.permute.xlu0 %436
  %438 = vrot.lane.b32.xlu0 %v398, 15
  %v439 = vpop.permute.xlu0 %438
  %v440 = vsel %vm86, %v437, %v439
  %v441 = vsel %vm86, %v435, %v437
  %v442 = vsel %vm86, %v433, %v435
  %v443 = vsel %vm86, %v439, %v433
  %v444 = vmul.f32 %v443, %v91
  %v445 = vmul.f32 %v442, %v92
  %v446 = vmul.f32 %v441, %v93
  %v447 = vmul.f32 %v440, %v94
  %448 = vrot.lane.b32.xlu0 %v395, 1
  %v449 = vpop.permute.xlu0 %448
  %450 = vrot.lane.b32.xlu0 %v396, 1
  %v451 = vpop.permute.xlu0 %450
  %452 = vrot.lane.b32.xlu0 %v397, 1
  %v453 = vpop.permute.xlu0 %452
  %454 = vrot.lane.b32.xlu0 %v398, 1
  %v455 = vpop.permute.xlu0 %454
  %v456 = vsel %vm107, %v453, %v455
  %v457 = vsel %vm107, %v451, %v453
  %v458 = vsel %vm107, %v449, %v451
  %v459 = vsel %vm107, %v455, %v449
  %v460 = vmul.f32 %v459, %v112
  %v461 = vmul.f32 %v458, %v113
  %v462 = vmul.f32 %v457, %v114
  %v463 = vmul.f32 %v456, %v115
  %464 = vrot.lane.b32.xlu0 %v395, 127
  %v465 = vpop.permute.xlu0 %464
  %466 = vrot.lane.b32.xlu0 %v396, 127
  %v467 = vpop.permute.xlu0 %466
  %468 = vrot.lane.b32.xlu0 %v397, 127
  %v469 = vpop.permute.xlu0 %468
  %470 = vrot.lane.b32.xlu0 %v398, 127
  %v471 = vpop.permute.xlu0 %470
  %v472 = vsel %vm128, %v469, %v471
  %v473 = vsel %vm128, %v467, %v469
  %v474 = vsel %vm128, %v465, %v467
  %v475 = vsel %vm128, %v471, %v465
  %v476 = vmul.f32 %v474, %v133
  %v477 = vmul.f32 %v473, %v134
  %v478 = vmul.f32 %v472, %v135
  %v479 = vmul.f32 %v475, %v136
  %480 = vrot.lane.b32.xlu0 %v395, 113
  %v481 = vpop.permute.xlu0 %480
  %482 = vrot.lane.b32.xlu0 %v396, 113
  %v483 = vpop.permute.xlu0 %482
  %484 = vrot.lane.b32.xlu0 %v397, 113
  %v485 = vpop.permute.xlu0 %484
  %486 = vrot.lane.b32.xlu0 %v398, 113
  %v487 = vpop.permute.xlu0 %486
  %v488 = vsel %vm149, %v485, %v487
  %v489 = vsel %vm149, %v483, %v485
  %v490 = vsel %vm149, %v481, %v483
  %v491 = vsel %vm149, %v487, %v481
  %v492 = vmul.f32 %v490, %v154
  %v493 = vmul.f32 %v489, %v155
  %v494 = vmul.f32 %v488, %v156
  %v495 = vmul.f32 %v491, %v157
  %496 = vrot.lane.b32.xlu0 %v395, 112
  %v497 = vpop.permute.xlu0 %496
  %498 = vrot.lane.b32.xlu0 %v396, 112
  %v499 = vpop.permute.xlu0 %498
  %500 = vrot.lane.b32.xlu0 %v397, 112
  %v501 = vpop.permute.xlu0 %500
  %502 = vrot.lane.b32.xlu0 %v398, 112
  %v503 = vpop.permute.xlu0 %502
  %v504 = vsel %vm170, %v501, %v503
  %v505 = vsel %vm170, %v499, %v501
  %v506 = vsel %vm170, %v497, %v499
  %v507 = vsel %vm170, %v503, %v497
  %v508 = vmul.f32 %v506, %v175
  %v509 = vmul.f32 %v505, %v176
  %v510 = vmul.f32 %v504, %v177
  %v511 = vmul.f32 %v507, %v178
  %512 = vrot.lane.b32.xlu0 %v395, 111
  %v513 = vpop.permute.xlu0 %512
  %514 = vrot.lane.b32.xlu0 %v396, 111
  %v515 = vpop.permute.xlu0 %514
  %516 = vrot.lane.b32.xlu0 %v397, 111
  %v517 = vpop.permute.xlu0 %516
  %518 = vrot.lane.b32.xlu0 %v398, 111
  %v519 = vpop.permute.xlu0 %518
  %v520 = vsel %vm191, %v517, %v519
  %v521 = vsel %vm191, %v515, %v517
  %v522 = vsel %vm191, %v513, %v515
  %v523 = vsel %vm191, %v519, %v513
  %v524 = vmul.f32 %v522, %v196
  %v525 = vmul.f32 %v521, %v197
  %v526 = vmul.f32 %v520, %v198
  %v527 = vmul.f32 %v523, %v199
  %v529 = vsel %vm204, %v399, 0
  %531 = vmatprep.subr.mxu0 0.0
  %532 = vmatpush1.msra.mxu0 0.0
  %533 = vmatprep.subr.mxu0 0.0
  %534 = vmatpush1.msra.mxu0 0.0
  %535 = vmatprep.subr.mxu0 0.0
  %536 = vmatpush1.msra.mxu0 0.0
  %537 = vmatprep.subr.mxu0 0.0
  %538 = vmatpush1.msra.mxu0 0.0
  %539 = vmatprep.subr.mxu0 0.0
  %540 = vmatpush1.msra.mxu0 0.0
  %541 = vmatprep.subr.mxu0 0.0
  %542 = vmatpush1.msra.mxu0 0.0
  %543 = vmatprep.subr.mxu0 0.0
  %544 = vmatpush1.msra.mxu0 0.0
  %545 = vmatprep.subr.mxu0 %v525
  %546 = vmatpush1.msra.mxu0 %v524
  %547 = vmatprep.subr.mxu0 %v509
  %548 = vmatpush1.msra.mxu0 %v508
  %549 = vmatprep.subr.mxu0 %v493
  %550 = vmatpush1.msra.mxu0 %v492
  %551 = vmatprep.subr.mxu0 %v477
  %552 = vmatpush1.msra.mxu0 %v476
  %553 = vmatprep.subr.mxu0 %v396
  %554 = vmatpush1.msra.mxu0 %v395
  %555 = vmatprep.subr.mxu0 %v461
  %556 = vmatpush1.msra.mxu0 %v460
  %557 = vmatprep.subr.mxu0 %v445
  %558 = vmatpush1.msra.mxu0 %v444
  %559 = vmatprep.subr.mxu0 %v429
  %560 = vmatpush1.msra.mxu0 %v428
  %561 = vmatprep.subr.mxu0 %v413
  %562 = vmatpush1.msra.mxu0 %v412
  %563 = vmatprep.subr.mxu0 0.0
  %564 = vmatpush2.msra.mxu0 0.0
  %565 = vmatprep.subr.mxu0 0.0
  %566 = vmatpush2.msra.mxu0 0.0
  %567 = vmatprep.subr.mxu0 0.0
  %568 = vmatpush2.msra.mxu0 0.0
  %569 = vmatprep.subr.mxu0 0.0
  %570 = vmatpush2.msra.mxu0 0.0
  %571 = vmatprep.subr.mxu0 0.0
  %572 = vmatpush2.msra.mxu0 0.0
  %573 = vmatprep.subr.mxu0 0.0
  %574 = vmatpush2.msra.mxu0 0.0
  %575 = vmatprep.subr.mxu0 0.0
  %576 = vmatpush2.msra.mxu0 0.0
  %577 = vmatprep.subr.mxu0 0.0
  %578 = vmatpush2.msra.mxu0 0.0
  %579 = vmatprep.subr.mxu0 0.0
  %580 = vmatpush2.msra.mxu0 0.0
  %581 = vmatprep.subr.mxu0 0.0
  %582 = vmatpush2.msra.mxu0 0.0
  %583 = vmatprep.subr.mxu0 0.0
  %584 = vmatpush2.msra.mxu0 0.0
  %585 = vmatprep.subr.mxu0 0.0
  %586 = vmatpush2.msra.mxu0 0.0
  %587 = vmatprep.subr.mxu0 0.0
  %588 = vmatpush2.msra.mxu0 0.0
  %589 = vmatprep.subr.mxu0 0.0
  %590 = vmatpush2.msra.mxu0 0.0
  %591 = vmatprep.subr.mxu0 0.0
  %592 = vmatpush2.msra.mxu0 0.0
  %593 = vmatprep.subr.mxu0 0.0
  %594 = vmatpush2.msra.mxu0 0.0
  %595 = vmatprep.mubr.f32.mxu0 0.0
  %596 = vmatmul.mubr.f32.gmra.mxu0 %v529
  %v597 = vpop.f32.mrf.mxu0
  %v598 = vadd.f32 0.0, %v597
  %v599 = vpop.f32.mrf.mxu0
  %v600 = vadd.f32 0.0, %v599
  %601 = vdwg.mxu0
  %602 = vmatprep.subr.mxu0 0.0
  %603 = vmatpush1.msra.mxu0 0.0
  %604 = vmatprep.subr.mxu0 0.0
  %605 = vmatpush1.msra.mxu0 0.0
  %606 = vmatprep.subr.mxu0 0.0
  %607 = vmatpush1.msra.mxu0 0.0
  %608 = vmatprep.subr.mxu0 0.0
  %609 = vmatpush1.msra.mxu0 0.0
  %610 = vmatprep.subr.mxu0 0.0
  %611 = vmatpush1.msra.mxu0 0.0
  %612 = vmatprep.subr.mxu0 0.0
  %613 = vmatpush1.msra.mxu0 0.0
  %614 = vmatprep.subr.mxu0 0.0
  %615 = vmatpush1.msra.mxu0 0.0
  %616 = vmatprep.subr.mxu0 %v527
  %617 = vmatpush1.msra.mxu0 %v526
  %618 = vmatprep.subr.mxu0 %v511
  %619 = vmatpush1.msra.mxu0 %v510
  %620 = vmatprep.subr.mxu0 %v495
  %621 = vmatpush1.msra.mxu0 %v494
  %622 = vmatprep.subr.mxu0 %v479
  %623 = vmatpush1.msra.mxu0 %v478
  %624 = vmatprep.subr.mxu0 %v398
  %625 = vmatpush1.msra.mxu0 %v397
  %626 = vmatprep.subr.mxu0 %v463
  %627 = vmatpush1.msra.mxu0 %v462
  %628 = vmatprep.subr.mxu0 %v447
  %629 = vmatpush1.msra.mxu0 %v446
  %630 = vmatprep.subr.mxu0 %v431
  %631 = vmatpush1.msra.mxu0 %v430
  %632 = vmatprep.subr.mxu0 %v415
  %633 = vmatpush1.msra.mxu0 %v414
  %634 = vmatprep.subr.mxu0 0.0
  %635 = vmatpush2.msra.mxu0 0.0
  %636 = vmatprep.subr.mxu0 0.0
  %637 = vmatpush2.msra.mxu0 0.0
  %638 = vmatprep.subr.mxu0 0.0
  %639 = vmatpush2.msra.mxu0 0.0
  %640 = vmatprep.subr.mxu0 0.0
  %641 = vmatpush2.msra.mxu0 0.0
  %642 = vmatprep.subr.mxu0 0.0
  %643 = vmatpush2.msra.mxu0 0.0
  %644 = vmatprep.subr.mxu0 0.0
  %645 = vmatpush2.msra.mxu0 0.0
  %646 = vmatprep.subr.mxu0 0.0
  %647 = vmatpush2.msra.mxu0 0.0
  %648 = vmatprep.subr.mxu0 0.0
  %649 = vmatpush2.msra.mxu0 0.0
  %650 = vmatprep.subr.mxu0 0.0
  %651 = vmatpush2.msra.mxu0 0.0
  %652 = vmatprep.subr.mxu0 0.0
  %653 = vmatpush2.msra.mxu0 0.0
  %654 = vmatprep.subr.mxu0 0.0
  %655 = vmatpush2.msra.mxu0 0.0
  %656 = vmatprep.subr.mxu0 0.0
  %657 = vmatpush2.msra.mxu0 0.0
  %658 = vmatprep.subr.mxu0 0.0
  %659 = vmatpush2.msra.mxu0 0.0
  %660 = vmatprep.subr.mxu0 0.0
  %661 = vmatpush2.msra.mxu0 0.0
  %662 = vmatprep.subr.mxu0 0.0
  %663 = vmatpush2.msra.mxu0 0.0
  %664 = vmatprep.subr.mxu0 0.0
  %665 = vmatpush2.msra.mxu0 0.0
  %666 = vmatprep.mubr.f32.mxu0 0.0
  %667 = vmatmul.mubr.f32.gmra.mxu0 %v529
  %v668 = vpop.f32.mrf.mxu0
  %v669 = vadd.f32 0.0, %v668
  %v670 = vpop.f32.mrf.mxu0
  %v671 = vadd.f32 0.0, %v670
  %672 = vdwg.mxu0
  %v673 = vld [vmem:[%s6] sm:$0xff]
  %v674 = vld [vmem:[%s7] sm:$0xff]
  %v675 = vadd.f32 %v598, %v600
  %v676 = vadd.f32 %v675, %v669
  %v677 = vadd.f32 %v676, %v671
  %678 = vadd.xlane.f32.xlu0 %v677
  %v679 = vpop.xlane.xlu0 %678
  %v680 = vmul.f32 %v679, 0.001953125
  %v681 = vmul.f32 %v598, %v598
  %v682 = vmul.f32 %v600, %v600
  %v683 = vmul.f32 %v669, %v669
  %v684 = vmul.f32 %v671, %v671
  %v685 = vadd.f32 %v681, %v682
  %v686 = vadd.f32 %v685, %v683
  %v687 = vadd.f32 %v686, %v684
  %688 = vadd.xlane.f32.xlu0 %v687
  %v689 = vpop.xlane.xlu0 %688
  %v690 = vmul.f32 %v689, 0.001953125
  %v691 = vmul.f32 %v680, %v680
  %v692 = vsub.f32 %v690, %v691
  %v693 = vadd.f32 %v692, 1e-05
  %v694 = vrsqrt.pop %v693
  %v695 = vmul.f32 %v694, %v673
  %v696 = vsub.f32 %v598, %v680
  %v697 = vsub.f32 %v600, %v680
  %v698 = vsub.f32 %v669, %v680
  %v699 = vsub.f32 %v671, %v680
  %701 = vset.pattern.permute.xlu0 0
  %702 = vperm.xlu0 %701, %v695
  %v703 = vpop.permute.xlu0 %702
  %v705 = vmul.f32 %v696, %v703
  %v706 = vmul.f32 %v697, %v703
  %v707 = vmul.f32 %v698, %v703
  %v708 = vmul.f32 %v699, %v703
  %710 = vset.pattern.permute.xlu0 0
  %711 = vperm.xlu0 %710, %v674
  %v712 = vpop.permute.xlu0 %711
  %v714 = vadd.f32 %v705, %v712
  %v715 = vadd.f32 %v706, %v712
  %v716 = vadd.f32 %v707, %v712
  %v717 = vadd.f32 %v708, %v712
  %v718 = vadd.f32 %v714, %v29
  %v719 = vadd.f32 %v715, %v30
  %v720 = vadd.f32 %v716, %v31
  %v721 = vadd.f32 %v717, %v32
  %v722 = vmax.f32 %v718, 0.0
  %v723 = vmax.f32 %v719, 0.0
  %v724 = vmax.f32 %v720, 0.0
  %v725 = vmax.f32 %v721, 0.0
  %726 = vst [vmem:[%s8] sm:$0xff] %v722
  %727 = vst [vmem:[%s8 + $0x8] sm:$0xff] %v723
  %728 = vst [vmem:[%s8 + $0x10] sm:$0xff] %v724
  %729 = vst [vmem:[%s8 + $0x18] sm:$0xff] %v725
  // Predicated region
  $region34: #{resblock_forward.1} parent=0 // pred_check
    _
  $region35: #{resblock_forward.1} parent=0 // pred_check_branch
    %731 = sbr.rel (0) target = $region37
  $region36: #{resblock_forward.1} parent=0 // pred_region
    _
  $region37: #{resblock_forward.1} parent=0 // pred_fallthru
    _
  // Predicated region
  $region38: #{resblock_forward.1} parent=0 // pred_check
    _
  $region39: #{resblock_forward.1} parent=0 // pred_check_branch
    %733 = sbr.rel (0) target = $region41
  $region40: #{resblock_forward.1} parent=0 // pred_region
    _
  $region41: #{resblock_forward.1} parent=0 // pred_fallthru
    _

</llo_original>
